<compile_context>
chip_gen: v5e
topology: v5e:2x2
jax: 0.10.0
libtpu: 0.0.40
codegen_flags: <defaults>
</compile_context>

<pallas_src>
import jax
import jax.numpy as jnp
from jax.experimental import pallas as pl
from jax.experimental.pallas import tpu as pltpu


def _output_layer_kernel(x_ref, w1_ref, b1_ref, w2_ref, b2_ref, o_ref):
    # x_ref : (1, K, bn)   K = Tin*Cin contraction axis, bn vertices on lanes
    # w1_ref: (H, K)       FC1 weight transposed (VMEM resident)
    # b1_ref: (H, 1)
    # w2_ref: (P, H)       FC2 weight transposed (VMEM resident)
    # b2_ref: (P, 1)
    # o_ref : (1, P, bn)   lane-dense output tile (vertices on lanes)

    # FC1: one K=Tin*Cin MXU dot (instead of Tin tiny K=Cin dots)
    h = jnp.dot(w1_ref[...], x_ref[0],
                preferred_element_type=jnp.float32)                   # (H, bn)
    h = jnp.maximum(h + b1_ref[...], 0.0)                             # bias + ReLU (f32)

    # FC2: (P, H) @ (H, bn) -> (P, bn)
    o = jnp.dot(w2_ref[...], h, preferred_element_type=jnp.float32)
    o = o + b2_ref[...]
    o_ref[0] = o.astype(o_ref.dtype)


def output_layer_forward(x, w1, b1, w2, b2, *, num_of_vertices, history,
                         in_dim, hidden_dim, horizon, bn=None,
                         use_bf16_inputs=False):
    """
    x : (B, Tin, N, Cin)  ->  returns (B, horizon, N)   (matches PyTorch module)
    w1: (Tin*Cin, hidden_dim)  == FC1.weight.T   , b1: (hidden_dim,)
    w2: (hidden_dim, horizon)  == FC2.weight.T   , b2: (horizon,)
    (Callers porting real nn.Linear weights (out, in) must pass W.T.)
    """
    B, Tin, N, Cin = x.shape
    assert (Tin, N, Cin) == (history, num_of_vertices, in_dim)
    K, H, P = Tin * Cin, hidden_dim, horizon
    assert w1.shape == (K, H), w1.shape
    assert w2.shape == (H, P), w2.shape

    compute_dtype = jnp.bfloat16 if use_bf16_inputs else jnp.float32

    # Flatten (Tin, Cin) into one K contraction axis with vertices LAST
    # (lane-dense):  x_kn[b, t*Cin + c, n] = x[b, t, n, c].  This matches the
    # module's permute(0,2,1,3)+reshape flattening order and gives the kernel
    # large contiguous HBM rows instead of 16-byte (Cin*4B) DMA granules.
    x_kn = jnp.transpose(x, (0, 1, 3, 2)).reshape(B, K, N).astype(compute_dtype)

    # Tiny one-time weight re-layouts (big dims end up on lanes in-kernel).
    w1_hk = jnp.transpose(w1, (1, 0)).astype(compute_dtype)      # (H, K)
    w2_ph = jnp.transpose(w2, (1, 0)).astype(compute_dtype)      # (P, H)
    b1_col = b1.reshape(H, 1).astype(jnp.float32)
    b2_col = b2.reshape(P, 1).astype(jnp.float32)

    # Vertex tile: lane-dense (multiple of 128) up to 1024 to amortize per-step
    # overhead, but keep >= ~8 total grid steps so each TensorCore (v7x has 2)
    # still has several steps to double-buffer over.  h=(H,bn) f32 stays within
    # the vreg budget for bn<=1024 at these hidden sizes.
    if bn is None:
        if N % 128 == 0:
            bn = min(N, 1024)
            while bn > 512 and (bn // 2) % 128 == 0 and B * pl.cdiv(N, bn) < 8:
                bn //= 2
        else:
            bn = N          # full-dim block is always layout-legal (small/odd N)
    n_tiles = pl.cdiv(N, bn)

    itemsize = jnp.dtype(compute_dtype).itemsize
    cost = pl.CostEstimate(
        flops=2 * B * N * (K * H + H * P),
        transcendentals=0,
        bytes_accessed=(B * K * N * itemsize              # x stream
                        + (K * H + H * P) * itemsize      # weights
                        + (H + P) * 4                     # biases
                        + B * P * N * 4))                 # f32 output

    out = pl.pallas_call(
        _output_layer_kernel,
        out_shape=jax.ShapeDtypeStruct((B, P, N), jnp.float32),
        grid_spec=pltpu.PrefetchScalarGridSpec(
            num_scalar_prefetch=0,
            grid=(B, n_tiles),
            in_specs=[
                # lane-dense x tile: one batch element, full K, bn vertices
                pl.BlockSpec((1, K, bn), lambda b, j: (b, 0, j)),
                pl.BlockSpec((H, K), lambda b, j: (0, 0)),     # W1^T (resident)
                pl.BlockSpec((H, 1), lambda b, j: (0, 0)),     # b1
                pl.BlockSpec((P, H), lambda b, j: (0, 0)),     # W2^T (resident)
                pl.BlockSpec((P, 1), lambda b, j: (0, 0)),     # b2
            ],
            # lane-dense output; the module's final permute(0,2,1) is fused here
            out_specs=pl.BlockSpec((1, P, bn), lambda b, j: (b, 0, j)),
        ),
        compiler_params=pltpu.CompilerParams(
            dimension_semantics=("parallel", "parallel"),
            vmem_limit_bytes=32 * 1024 * 1024,   # far above actual use; safe on v7x's 64 MiB
        ),
        cost_estimate=cost,
    )(x_kn, w1_hk, b1_col, w2_ph, b2_col)
    return out


def _reference(x, w1, b1, w2, b2, N, Tin, Cin, P):
    B = x.shape[0]
    xf = jnp.transpose(x, (0, 2, 1, 3)).reshape(B * N, Tin * Cin)
    r = jnp.maximum(xf @ w1 + b1, 0.0) @ w2 + b2
    return jnp.transpose(r.reshape(B, N, P), (0, 2, 1))


if __name__ == "__main__":
    # Small deterministic problem consistent with the module's forward.
    B, Tin, N, Cin = 2, 8, 16, 4
    hidden_dim, horizon = 32, 12

    key = jax.random.PRNGKey(0)
    kx, kw1, kb1, kw2, kb2 = jax.random.split(key, 5)

    x = jax.random.normal(kx, (B, Tin, N, Cin), dtype=jnp.float32)
    # nn.Linear(Tin*Cin -> hidden) weight stored transposed (K, H) so math is x @ W.
    w1 = jax.random.normal(kw1, (Tin * Cin, hidden_dim), dtype=jnp.float32) * 0.1
    b1 = jax.random.normal(kb1, (hidden_dim,), dtype=jnp.float32) * 0.1
    w2 = jax.random.normal(kw2, (hidden_dim, horizon), dtype=jnp.float32) * 0.1
    b2 = jax.random.normal(kb2, (horizon,), dtype=jnp.float32) * 0.1

    out = output_layer_forward(
        x, w1, b1, w2, b2,
        num_of_vertices=N, history=Tin, in_dim=Cin,
        hidden_dim=hidden_dim, horizon=horizon)
    out = jax.block_until_ready(out)

    ref = _reference(x, w1, b1, w2, b2, N, Tin, Cin, horizon)
    assert out.shape == (B, horizon, N), out.shape
    assert jnp.allclose(out, ref, atol=1e-5, rtol=1e-5)

    # Larger vertex count: exercises the lane-dense multi-tile path (bn=512, grid (2,2)).
    N2 = 1024
    x2 = jax.random.normal(jax.random.fold_in(kx, 1), (B, Tin, N2, Cin),
                           dtype=jnp.float32)
    out2 = jax.block_until_ready(output_layer_forward(
        x2, w1, b1, w2, b2,
        num_of_vertices=N2, history=Tin, in_dim=Cin,
        hidden_dim=hidden_dim, horizon=horizon))
    ref2 = _reference(x2, w1, b1, w2, b2, N2, Tin, Cin, horizon)
    assert out2.shape == (B, horizon, N2), out2.shape
    assert jnp.allclose(out2, ref2, atol=1e-5, rtol=1e-5)

    # bf16-input option (halves HBM bytes on the x stream; f32 accumulation),
    # checked with a loose tolerance.
    out3 = jax.block_until_ready(output_layer_forward(
        x2, w1, b1, w2, b2,
        num_of_vertices=N2, history=Tin, in_dim=Cin,
        hidden_dim=hidden_dim, horizon=horizon, use_bf16_inputs=True))
    assert out3.shape == (B, horizon, N2), out3.shape
    assert jnp.allclose(out3, ref2, atol=5e-2, rtol=5e-2)

    print("KERNEL_OK")
</pallas_src>

<mosaic_0001>
module attributes {stable_mosaic.version = 11 : i64} {
  func.func @_output_layer_kernel(%arg0: i32, %arg1: i32, %arg2: memref<1x32x16xf32, #tpu.memory_space<vmem>>, %arg3: memref<32x32xf32, #tpu.memory_space<vmem>>, %arg4: memref<32x1xf32, #tpu.memory_space<vmem>>, %arg5: memref<12x32xf32, #tpu.memory_space<vmem>>, %arg6: memref<12x1xf32, #tpu.memory_space<vmem>>, %arg7: memref<1x12x16xf32, #tpu.memory_space<vmem>>) attributes {dimension_semantics = [#tpu.dimension_semantics<parallel>, #tpu.dimension_semantics<parallel>], iteration_bounds = array<i64: 2, 1>, scalar_prefetch = 0 : i64, scratch_operands = 0 : i64, tpu.core_type = #tpu.core_type<tc>, window_params = [{transform_indices = @transform_0, window_bounds = array<i64: 1, 32, 16>}, {pipeline_mode = #tpu.pipeline_mode<synchronous>, transform_indices = @transform_1, window_bounds = array<i64: 32, 32>}, {pipeline_mode = #tpu.pipeline_mode<synchronous>, transform_indices = @transform_2, window_bounds = array<i64: 32, 1>}, {pipeline_mode = #tpu.pipeline_mode<synchronous>, transform_indices = @transform_3, window_bounds = array<i64: 12, 32>}, {pipeline_mode = #tpu.pipeline_mode<synchronous>, transform_indices = @transform_4, window_bounds = array<i64: 12, 1>}, {transform_indices = @transform_5, window_bounds = array<i64: 1, 12, 16>}]} {
    %c0 = arith.constant 0 : index
    %c0_0 = arith.constant 0 : index
    %0 = vector.load %arg3[%c0, %c0_0] : memref<32x32xf32, #tpu.memory_space<vmem>>, vector<32x32xf32>
    %c0_1 = arith.constant 0 : index
    %c0_2 = arith.constant 0 : index
    %c0_3 = arith.constant 0 : index
    %1 = vector.load %arg2[%c0_1, %c0_2, %c0_3] : memref<1x32x16xf32, #tpu.memory_space<vmem>>, vector<1x32x16xf32>
    %2 = vector.shape_cast %1 : vector<1x32x16xf32> to vector<32x16xf32>
    %cst = arith.constant dense<0.000000e+00> : vector<32x16xf32>
    %3 = tpu.matmul %0, %2, %cst {dimension_numbers = #tpu.dot_dimension_numbers<[1], [0], [0], [1], [0, 0, 1, 1], [], []>} : vector<32x32xf32>, vector<32x16xf32>, vector<32x16xf32> -> vector<32x16xf32>
    %c0_4 = arith.constant 0 : index
    %c0_5 = arith.constant 0 : index
    %4 = vector.load %arg4[%c0_4, %c0_5] : memref<32x1xf32, #tpu.memory_space<vmem>>, vector<32x1xf32>
    %5 = vector.broadcast %4 : vector<32x1xf32> to vector<32x16xf32>
    %6 = arith.addf %3, %5 : vector<32x16xf32>
    %cst_6 = arith.constant 0.000000e+00 : f32
    %7 = vector.broadcast %cst_6 : f32 to vector<32x16xf32>
    %8 = arith.maximumf %6, %7 : vector<32x16xf32>
    %c0_7 = arith.constant 0 : index
    %c0_8 = arith.constant 0 : index
    %9 = vector.load %arg5[%c0_7, %c0_8] : memref<12x32xf32, #tpu.memory_space<vmem>>, vector<12x32xf32>
    %cst_9 = arith.constant dense<0.000000e+00> : vector<12x16xf32>
    %10 = tpu.matmul %9, %8, %cst_9 {dimension_numbers = #tpu.dot_dimension_numbers<[1], [0], [0], [1], [0, 0, 1, 1], [], []>} : vector<12x32xf32>, vector<32x16xf32>, vector<12x16xf32> -> vector<12x16xf32>
    %c0_10 = arith.constant 0 : index
    %c0_11 = arith.constant 0 : index
    %11 = vector.load %arg6[%c0_10, %c0_11] : memref<12x1xf32, #tpu.memory_space<vmem>>, vector<12x1xf32>
    %12 = vector.broadcast %11 : vector<12x1xf32> to vector<12x16xf32>
    %13 = arith.addf %10, %12 : vector<12x16xf32>
    %c0_12 = arith.constant 0 : index
    %c0_13 = arith.constant 0 : index
    %c0_14 = arith.constant 0 : index
    %14 = vector.load %arg7[%c0_12, %c0_13, %c0_14] : memref<1x12x16xf32, #tpu.memory_space<vmem>>, vector<1x12x16xf32>
    %15 = vector.shape_cast %14 : vector<1x12x16xf32> to vector<12x16xf32>
    %16 = vector.shape_cast %13 : vector<12x16xf32> to vector<1x12x16xf32>
    tpu.vector_store %arg7[%c0_12, %c0_13, %c0_14], %16 {strides = array<i32>} : memref<1x12x16xf32, #tpu.memory_space<vmem>>, vector<1x12x16xf32>,
    return
  }
  func.func @transform_0(%arg0: i32, %arg1: i32) -> (i32, i32, i32) {
    %c0_i32 = arith.constant 0 : i32
    %c0_i32_0 = arith.constant 0 : i32
    return %arg0, %c0_i32, %arg1 : i32, i32, i32
  }
  func.func @transform_1(%arg0: i32, %arg1: i32) -> (i32, i32) {
    %c0_i32 = arith.constant 0 : i32
    %c0_i32_0 = arith.constant 0 : i32
    %c0_i32_1 = arith.constant 0 : i32
    return %c0_i32, %c0_i32_0 : i32, i32
  }
  func.func @transform_2(%arg0: i32, %arg1: i32) -> (i32, i32) {
    %c0_i32 = arith.constant 0 : i32
    %c0_i32_0 = arith.constant 0 : i32
    %c0_i32_1 = arith.constant 0 : i32
    return %c0_i32, %c0_i32_0 : i32, i32
  }
  func.func @transform_3(%arg0: i32, %arg1: i32) -> (i32, i32) {
    %c0_i32 = arith.constant 0 : i32
    %c0_i32_0 = arith.constant 0 : i32
    %c0_i32_1 = arith.constant 0 : i32
    return %c0_i32, %c0_i32_0 : i32, i32
  }
  func.func @transform_4(%arg0: i32, %arg1: i32) -> (i32, i32) {
    %c0_i32 = arith.constant 0 : i32
    %c0_i32_0 = arith.constant 0 : i32
    %c0_i32_1 = arith.constant 0 : i32
    return %c0_i32, %c0_i32_0 : i32, i32
  }
  func.func @transform_5(%arg0: i32, %arg1: i32) -> (i32, i32, i32) {
    %c0_i32 = arith.constant 0 : i32
    %c0_i32_0 = arith.constant 0 : i32
    return %arg0, %c0_i32, %arg1 : i32, i32, i32
  }
}

</mosaic_0001>

<llo_original>
// kernel: tpu_custom_call.1
$region0: #{tpu_custom_call.1}
  #allocation0 [shape = 'u32[]', space=smem, size = 0x4, offset = 0x4, fixed_abs, tag = 'smem constant byte address 0x4 - core index']
  #allocation1 [shape = 'u32[72,128]{1,0:T(1,128)}', space=vmem, size = 0x9000, scoped, tag = 'internal scratch']
  %s0 = inlined_call_operand.vmem [shape: f32[2,32,16], index: 0, kind: input, shape index: {}]
  %s1 = inlined_call_operand.vmem [shape: f32[32,32], index: 1, kind: input, shape index: {}]
  %s2 = inlined_call_operand.vmem [shape: f32[32,1], index: 2, kind: input, shape index: {}]
  %s3 = inlined_call_operand.vmem [shape: f32[12,32], index: 3, kind: input, shape index: {}]
  %s4 = inlined_call_operand.vmem [shape: f32[12,1], index: 4, kind: input, shape index: {}]
  %s5 = inlined_call_operand.vmem [shape: f32[2,12,16], index: 5, kind: output, shape index: {}]
  %s6 = sld [smem:[#allocation0]]
  $region53: #{tpu_custom_call.1} parent=0
    _
  %s8 = ssub.s32 1, %s6
  %s9 = scalar_select 0, %s8, %s6
  loop: start=0, step=1, limit=4
  $region2: #{tpu_custom_call.1} parent=0 // loop_pre_header
    _
  $region3: #{tpu_custom_call.1} parent=0 // loop_header
    %s11 = sphi 0, %s15
    %p12 = scmp.ge.s32.totalorder %s11, 4
    %s18 = sphi 0, %s30
    %s19 = sphi 0, %s26
    %s20 = sphi 0, %s18
    %s21 = sphi 0, %s19
    %s22 = sphi 0, %s20
    %s23 = sphi 0, %s21
    %s35 = sphi 0, %s37
    %s38 = sphi 0, %s35
    %s39 = sphi 0, %s38
    %s55 = sphi 0, %s39
    %s59 = sphi 0, %s59
    %s61 = sphi 0, %s59
    %s62 = sphi 0, %s61
    %s76 = sphi 0, %s62
    %s80 = sphi 0, %s80
    %s82 = sphi 0, %s80
    %s83 = sphi 0, %s82
    %s97 = sphi 0, %s83
    %s101 = sphi 0, %s101
    %s103 = sphi 0, %s101
    %s104 = sphi 0, %s103
    %s118 = sphi 0, %s104
    %s122 = sphi 0, %s122
    %s124 = sphi 0, %s122
    %s125 = sphi 0, %s124
    %s139 = sphi 0, %s125
    %s147 = sphi 0, %s149
    %s150 = sphi 0, %s147
    %s151 = sphi 0, %s150
    %s167 = sphi 0, %s151
  $region4: #{tpu_custom_call.1} parent=0 // loop_header_branch
    %14 = sbr.rel (%p12) target = $region8
  $region5: #{tpu_custom_call.1} parent=0 // loop_body
    %s16 = ssub.s32 %s11, 1
    %s17 = ssub.s32 %s11, 2
    %s24 = sadd.s32 1, %s19
    %p25 = scmp.ge.s32.totalorder %s24, 1
    %s26 = scalar_select %p25, 0, %s24
    %s27 = sadd.s32 1, %s18
    %s28 = scalar_select %p25, %s27, %s18
    %p29 = scmp.ge.s32.totalorder %s28, 2
    %s30 = scalar_select %p29, 0, %s28
    %s31 = ssub.s32 %s18, %s30
    %s32 = ssub.s32 %s19, %s26
    %s33 = sor.u32 %s31, %s32
    %p34 = scmp.eq.s32.totalorder %s33, 0
    %s36 = sadd.s32 %s35, 1
    %s37 = scalar_select %p34, %s35, %s36
    %p40 = pneg %p34
    %p41 = scmp.eq.s32.totalorder %s11, 1
    %p42 = por %p40, %p41
    %p43 = scmp.ne.s32.totalorder %s35, %s38
    %p44 = scmp.eq.s32.totalorder %s11, 0
    %p45 = por %p43, %p44
    %p46 = scmp.ne.s32.totalorder %s35, %s38
    %p47 = scmp.eq.s32.totalorder %s16, 1
    %p48 = por %p46, %p47
    %p49 = scmp.ne.s32.totalorder %s38, %s39
    %p50 = scmp.eq.s32.totalorder %s16, 0
    %p51 = por %p49, %p50
    %p52 = scmp.ne.s32.totalorder %s38, %s39
    %p53 = scmp.eq.s32.totalorder %s17, 1
    %p54 = por %p52, %p53
    %p56 = scmp.ne.s32.totalorder %s39, %s55
    %p57 = scmp.eq.s32.totalorder %s17, 0
    %p58 = por %p56, %p57
    %s60 = sadd.s32 %s59, 1
    %p63 = scmp.eq.s32.totalorder %s11, 1
    %p64 = scmp.ne.s32.totalorder %s59, %s61
    %p65 = scmp.eq.s32.totalorder %s11, 0
    %p66 = por %p64, %p65
    %p67 = scmp.ne.s32.totalorder %s59, %s61
    %p68 = scmp.eq.s32.totalorder %s16, 1
    %p69 = por %p67, %p68
    %p70 = scmp.ne.s32.totalorder %s61, %s62
    %p71 = scmp.eq.s32.totalorder %s16, 0
    %p72 = por %p70, %p71
    %p73 = scmp.ne.s32.totalorder %s61, %s62
    %p74 = scmp.eq.s32.totalorder %s17, 1
    %p75 = por %p73, %p74
    %p77 = scmp.ne.s32.totalorder %s62, %s76
    %p78 = scmp.eq.s32.totalorder %s17, 0
    %p79 = por %p77, %p78
    %s81 = sadd.s32 %s80, 1
    %p84 = scmp.eq.s32.totalorder %s11, 1
    %p85 = scmp.ne.s32.totalorder %s80, %s82
    %p86 = scmp.eq.s32.totalorder %s11, 0
    %p87 = por %p85, %p86
    %p88 = scmp.ne.s32.totalorder %s80, %s82
    %p89 = scmp.eq.s32.totalorder %s16, 1
    %p90 = por %p88, %p89
    %p91 = scmp.ne.s32.totalorder %s82, %s83
    %p92 = scmp.eq.s32.totalorder %s16, 0
    %p93 = por %p91, %p92
    %p94 = scmp.ne.s32.totalorder %s82, %s83
    %p95 = scmp.eq.s32.totalorder %s17, 1
    %p96 = por %p94, %p95
    %p98 = scmp.ne.s32.totalorder %s83, %s97
    %p99 = scmp.eq.s32.totalorder %s17, 0
    %p100 = por %p98, %p99
    %s102 = sadd.s32 %s101, 1
    %p105 = scmp.eq.s32.totalorder %s11, 1
    %p106 = scmp.ne.s32.totalorder %s101, %s103
    %p107 = scmp.eq.s32.totalorder %s11, 0
    %p108 = por %p106, %p107
    %p109 = scmp.ne.s32.totalorder %s101, %s103
    %p110 = scmp.eq.s32.totalorder %s16, 1
    %p111 = por %p109, %p110
    %p112 = scmp.ne.s32.totalorder %s103, %s104
    %p113 = scmp.eq.s32.totalorder %s16, 0
    %p114 = por %p112, %p113
    %p115 = scmp.ne.s32.totalorder %s103, %s104
    %p116 = scmp.eq.s32.totalorder %s17, 1
    %p117 = por %p115, %p116
    %p119 = scmp.ne.s32.totalorder %s104, %s118
    %p120 = scmp.eq.s32.totalorder %s17, 0
    %p121 = por %p119, %p120
    %s123 = sadd.s32 %s122, 1
    %p126 = scmp.eq.s32.totalorder %s11, 1
    %p127 = scmp.ne.s32.totalorder %s122, %s124
    %p128 = scmp.eq.s32.totalorder %s11, 0
    %p129 = por %p127, %p128
    %p130 = scmp.ne.s32.totalorder %s122, %s124
    %p131 = scmp.eq.s32.totalorder %s16, 1
    %p132 = por %p130, %p131
    %p133 = scmp.ne.s32.totalorder %s124, %s125
    %p134 = scmp.eq.s32.totalorder %s16, 0
    %p135 = por %p133, %p134
    %p136 = scmp.ne.s32.totalorder %s124, %s125
    %p137 = scmp.eq.s32.totalorder %s17, 1
    %p138 = por %p136, %p137
    %p140 = scmp.ne.s32.totalorder %s125, %s139
    %p141 = scmp.eq.s32.totalorder %s17, 0
    %p142 = por %p140, %p141
    %s143 = ssub.s32 %s18, %s30
    %s144 = ssub.s32 %s19, %s26
    %s145 = sor.u32 %s143, %s144
    %p146 = scmp.eq.s32.totalorder %s145, 0
    %s148 = sadd.s32 %s147, 1
    %s149 = scalar_select %p146, %s147, %s148
    %p152 = pneg %p146
    %p153 = scmp.eq.s32.totalorder %s11, 1
    %p154 = por %p152, %p153
    %p155 = scmp.ne.s32.totalorder %s147, %s150
    %p156 = scmp.eq.s32.totalorder %s11, 0
    %p157 = por %p155, %p156
    %p158 = scmp.ne.s32.totalorder %s147, %s150
    %p159 = scmp.eq.s32.totalorder %s16, 1
    %p160 = por %p158, %p159
    %p161 = scmp.ne.s32.totalorder %s150, %s151
    %p162 = scmp.eq.s32.totalorder %s16, 0
    %p163 = por %p161, %p162
    %p164 = scmp.ne.s32.totalorder %s150, %s151
    %p165 = scmp.eq.s32.totalorder %s17, 1
    %p166 = por %p164, %p165
    %p168 = scmp.ne.s32.totalorder %s151, %s167
    %p169 = scmp.eq.s32.totalorder %s17, 0
    %p170 = por %p168, %p169
    %p171 = scmp.le.s32.totalorder 1, %s11
    %p172 = scmp.lt.s32.totalorder %s11, 3
    %p173 = pnand %p171, %p172
    %p174 = pneg %p173
    // Predicated region
    $region9: #{tpu_custom_call.1} parent=5 // pred_check
      _
    $region10: #{tpu_custom_call.1} parent=5 // pred_check_branch
      %176 = sbr.rel (%p173) target = $region12
    $region11: #{tpu_custom_call.1} parent=5 // pred_region
      %s177 = ssub.s32 %s11, 1
      // Predicated region
      $region13: #{tpu_custom_call.1} parent=11 // pred_check
        %p178 = pneg %p72
      $region14: #{tpu_custom_call.1} parent=11 // pred_check_branch
        %180 = sbr.rel (%p178) target = $region16
      $region15: #{tpu_custom_call.1} parent=11 // pred_region
        _
      $region16: #{tpu_custom_call.1} parent=11 // pred_fallthru
        _
      // Predicated region
      $region17: #{tpu_custom_call.1} parent=11 // pred_check
        %p181 = pneg %p93
      $region18: #{tpu_custom_call.1} parent=11 // pred_check_branch
        %183 = sbr.rel (%p181) target = $region20
      $region19: #{tpu_custom_call.1} parent=11 // pred_region
        _
      $region20: #{tpu_custom_call.1} parent=11 // pred_fallthru
        _
      // Predicated region
      $region21: #{tpu_custom_call.1} parent=11 // pred_check
        %p184 = pneg %p114
      $region22: #{tpu_custom_call.1} parent=11 // pred_check_branch
        %186 = sbr.rel (%p184) target = $region24
      $region23: #{tpu_custom_call.1} parent=11 // pred_region
        _
      $region24: #{tpu_custom_call.1} parent=11 // pred_fallthru
        _
      // Predicated region
      $region25: #{tpu_custom_call.1} parent=11 // pred_check
        %p187 = pneg %p135
      $region26: #{tpu_custom_call.1} parent=11 // pred_check_branch
        %189 = sbr.rel (%p187) target = $region28
      $region27: #{tpu_custom_call.1} parent=11 // pred_region
        _
      $region28: #{tpu_custom_call.1} parent=11 // pred_fallthru
        _
    $region12: #{tpu_custom_call.1} parent=5 // pred_fallthru
      _
    %p190 = scmp.lt.s32.totalorder %s11, 2
    // Predicated region
    $region29: #{tpu_custom_call.1} parent=5 // pred_check
      %p191 = pneg %p190
    $region30: #{tpu_custom_call.1} parent=5 // pred_check_branch
      %193 = sbr.rel (%p191) target = $region32
    $region31: #{tpu_custom_call.1} parent=5 // pred_region
      // Predicated region
      $region33: #{tpu_custom_call.1} parent=31 // pred_check
        %p194 = pneg %p45
      $region34: #{tpu_custom_call.1} parent=31 // pred_check_branch
        %196 = sbr.rel (%p194) target = $region36
      $region35: #{tpu_custom_call.1} parent=31 // pred_region
        %p197 = scmp.lt.s32.totalorder %s18, 1
        %s198 = scalar_select %p197, %s18, 1
        %p199 = scmp.lt.s32.totalorder %s19, 0
        %s200 = scalar_select %p199, %s19, 0
        %s201 = smul.addr %s198, 4
        %s202 = sadd.s32 %s200, %s201
        %s203 = smul.addr %s202, 8
        %s204 = scalar_lea.vmem %s0, %s203
      $region36: #{tpu_custom_call.1} parent=31 // pred_fallthru
        _
    $region32: #{tpu_custom_call.1} parent=5 // pred_fallthru
      _
    %p205 = scmp.le.s32.totalorder 1, %s11
    %p206 = scmp.lt.s32.totalorder %s11, 3
    %p207 = pnand %p205, %p206
    %p208 = pneg %p207
    // Predicated region
    $region37: #{tpu_custom_call.1} parent=5 // pred_check
      _
    $region38: #{tpu_custom_call.1} parent=5 // pred_check_branch
      %210 = sbr.rel (%p207) target = $region40
    $region39: #{tpu_custom_call.1} parent=5 // pred_region
      %s211 = ssub.s32 %s11, 1
      %p212 = scmp.lt.s32.totalorder %s20, 1
      %s213 = scalar_select %p212, %s20, 1
      %p214 = scmp.lt.s32.totalorder %s21, 0
      %s215 = scalar_select %p214, %s21, 0
      %s216 = smul.addr %s213, 4
      %s217 = sadd.s32 %s215, %s216
      %s218 = smul.addr %s217, 8
      %s219 = scalar_lea.vmem %s0, %s218
      %p220 = pneg %p51
      %p221 = pneg %p48
      %p222 = pneg %p72
      %p223 = pneg %p69
      %p224 = pneg %p93
      %p225 = pneg %p90
      %p226 = pneg %p114
      %p227 = pneg %p111
      %p228 = pneg %p135
      %p229 = pneg %p132
      %p230 = pneg %p163
      %p231 = pneg %p160
      %p232 = scmp.lt.s32.totalorder %s20, 1
      %s233 = scalar_select %p232, %s20, 1
      %p234 = scmp.lt.s32.totalorder %s21, 0
      %s235 = scalar_select %p234, %s21, 0
      %s236 = smul.addr %s233, 2
      %s237 = sadd.s32 %s235, %s236
      %s238 = smul.addr %s237, 8
      %s239 = scalar_lea.vmem %s5, %s238
      %p240 = scmp.lt.s32.totalorder %s20, 1
      %s241 = scalar_select %p240, %s20, 1
      %p242 = scmp.lt.s32.totalorder %s21, 0
      %s243 = scalar_select %p242, %s21, 0
      %s244 = smul.addr %s241, 4
      %s245 = sadd.s32 %s243, %s244
      %s246 = smul.addr %s245, 8
      %s247 = scalar_lea.vmem %s0, %s246
      %p248 = scmp.lt.s32.totalorder %s20, 1
      %s249 = scalar_select %p248, %s20, 1
      %p250 = scmp.lt.s32.totalorder %s21, 0
      %s251 = scalar_select %p250, %s21, 0
      %s252 = smul.addr %s249, 2
      %s253 = sadd.s32 %s251, %s252
      %s254 = smul.addr %s253, 8
      %s255 = scalar_lea.vmem %s5, %s254
      %v256 = vld [vmem:[%s1] sm:$0xff]
      %v257 = vld [vmem:[%s1 + $0x8] sm:$0xff]
      %v258 = vld [vmem:[%s1 + $0x10] sm:$0xff]
      %v259 = vld [vmem:[%s1 + $0x18] sm:$0xff]
      %v260 = vld [vmem:[%s247] sm:$0xff]
      %v261 = vld [vmem:[%s247 + $0x8] sm:$0xff]
      %v262 = vld [vmem:[%s247 + $0x10] sm:$0xff]
      %v263 = vld [vmem:[%s247 + $0x18] sm:$0xff]
      %v264 = vld [vmem:[%s2] sm:$0xff]
      %v265 = vld [vmem:[%s2 + $0x8] sm:$0xff]
      %v266 = vld [vmem:[%s2 + $0x10] sm:$0xff]
      %v267 = vld [vmem:[%s2 + $0x18] sm:$0xff]
      %269 = vset.pattern.permute.xlu0 0
      %270 = vperm.xlu0 %269, %v264
      %v271 = vpop.permute.xlu0 %270
      %274 = vset.pattern.permute.xlu0 0
      %275 = vperm.xlu0 %274, %v265
      %v276 = vpop.permute.xlu0 %275
      %279 = vset.pattern.permute.xlu0 0
      %280 = vperm.xlu0 %279, %v266
      %v281 = vpop.permute.xlu0 %280
      %284 = vset.pattern.permute.xlu0 0
      %285 = vperm.xlu0 %284, %v267
      %v286 = vpop.permute.xlu0 %285
      %vm288 = vcmask 261120
      %v290 = vsel %vm288, %v256, 0
      %v293 = vsel %vm288, %v257, 0
      %v296 = vsel %vm288, %v258, 0
      %v299 = vsel %vm288, %v259, 0
      %301 = vmatpush.msra.mxu0 0.0
      %302 = vmatpush.msra.mxu0 0.0
      %303 = vmatpush.msra.mxu0 0.0
      %304 = vmatpush.msra.mxu0 0.0
      %305 = vmatpush.msra.mxu0 0.0
      %306 = vmatpush.msra.mxu0 0.0
      %307 = vmatpush.msra.mxu0 0.0
      %308 = vmatpush.msra.mxu0 0.0
      %309 = vmatpush.msra.mxu0 0.0
      %310 = vmatpush.msra.mxu0 0.0
      %311 = vmatpush.msra.mxu0 0.0
      %312 = vmatpush.msra.mxu0 0.0
      %313 = vmatpush.msra.mxu0 %v263
      %314 = vmatpush.msra.mxu0 %v262
      %315 = vmatpush.msra.mxu0 %v261
      %316 = vmatpush.msra.mxu0 %v260
      %317 = vmatmul.f32.gmra.mxu0 %v290
      %v318 = vpop.f32.mrf.mxu0
      %v319 = vadd.f32 %v271, %v318
      %320 = vmatmul.f32.gmra.mxu0 %v293
      %v321 = vpop.f32.mrf.mxu0
      %v322 = vadd.f32 %v276, %v321
      %323 = vmatmul.f32.gmra.mxu0 %v296
      %v324 = vpop.f32.mrf.mxu0
      %v325 = vadd.f32 %v281, %v324
      %326 = vmatmul.f32.gmra.mxu0 %v299
      %v327 = vpop.f32.mrf.mxu0
      %v328 = vadd.f32 %v286, %v327
      %329 = vdwg.mxu0
      %v330 = vmax.f32 %v319, 0.0
      %v331 = vmax.f32 %v322, 0.0
      %v332 = vmax.f32 %v325, 0.0
      %v333 = vmax.f32 %v328, 0.0
      %v334 = vld [vmem:[%s3] sm:$0xff]
      %v335 = vld [vmem:[%s3 + $0x8] sm:$0xf]
      %v336 = vld [vmem:[%s4] sm:$0xff]
      %v337 = vld [vmem:[%s4 + $0x8] sm:$0xf]
      %339 = vset.pattern.permute.xlu0 0
      %340 = vperm.xlu0 %339, %v336
      %v341 = vpop.permute.xlu0 %340
      %344 = vset.pattern.permute.xlu0 0
      %345 = vperm.xlu0 %344, %v337
      %v346 = vpop.permute.xlu0 %345
      %v349 = vsel %vm288, %v334, 0
      %v352 = vsel %vm288, %v335, 0
      %354 = vmatpush.msra.mxu0 0.0
      %355 = vmatpush.msra.mxu0 0.0
      %356 = vmatpush.msra.mxu0 0.0
      %357 = vmatpush.msra.mxu0 0.0
      %358 = vmatpush.msra.mxu0 0.0
      %359 = vmatpush.msra.mxu0 0.0
      %360 = vmatpush.msra.mxu0 0.0
      %361 = vmatpush.msra.mxu0 0.0
      %362 = vmatpush.msra.mxu0 0.0
      %363 = vmatpush.msra.mxu0 0.0
      %364 = vmatpush.msra.mxu0 0.0
      %365 = vmatpush.msra.mxu0 0.0
      %366 = vmatpush.msra.mxu0 %v333
      %367 = vmatpush.msra.mxu0 %v332
      %368 = vmatpush.msra.mxu0 %v331
      %369 = vmatpush.msra.mxu0 %v330
      %370 = vmatmul.f32.gmra.mxu0 %v349
      %v371 = vpop.f32.mrf.mxu0
      %v372 = vadd.f32 %v341, %v371
      %373 = vmatmul.f32.gmra.mxu0 %v352
      %v374 = vpop.f32.mrf.mxu0
      %v375 = vadd.f32 %v346, %v374
      %376 = vdwg.mxu0
      %vm377 = vcmask 130048
      %378 = vst.msk [vmem:[%s255] sm:$0xff] %vm377, %v372
      %vm379 = vcmask 125952
      %380 = vst.msk [vmem:[%s255 + $0x8] sm:$0xf] %vm379, %v375
      %p381 = scmp.lt.s32.totalorder %s20, 1
      %s382 = scalar_select %p381, %s20, 1
      %p383 = scmp.lt.s32.totalorder %s21, 0
      %s384 = scalar_select %p383, %s21, 0
      %s385 = smul.addr %s382, 2
      %s386 = sadd.s32 %s384, %s385
      %s387 = smul.addr %s386, 8
      %s388 = scalar_lea.vmem %s5, %s387
      // Predicated region
      $region41: #{tpu_custom_call.1} parent=39 // pred_check
        %p389 = pneg %p160
      $region42: #{tpu_custom_call.1} parent=39 // pred_check_branch
        %391 = sbr.rel (%p389) target = $region44
      $region43: #{tpu_custom_call.1} parent=39 // pred_region
        _
      $region44: #{tpu_custom_call.1} parent=39 // pred_fallthru
        _
    $region40: #{tpu_custom_call.1} parent=5 // pred_fallthru
      _
    %p392 = scmp.le.s32.totalorder 2, %s11
    // Predicated region
    $region45: #{tpu_custom_call.1} parent=5 // pred_check
      %p393 = pneg %p392
    $region46: #{tpu_custom_call.1} parent=5 // pred_check_branch
      %395 = sbr.rel (%p393) target = $region48
    $region47: #{tpu_custom_call.1} parent=5 // pred_region
      %s396 = ssub.s32 %s11, 2
      // Predicated region
      $region49: #{tpu_custom_call.1} parent=47 // pred_check
        %p397 = pneg %p166
      $region50: #{tpu_custom_call.1} parent=47 // pred_check_branch
        %399 = sbr.rel (%p397) target = $region52
      $region51: #{tpu_custom_call.1} parent=47 // pred_region
        %p400 = scmp.lt.s32.totalorder %s22, 1
        %s401 = scalar_select %p400, %s22, 1
        %p402 = scmp.lt.s32.totalorder %s23, 0
        %s403 = scalar_select %p402, %s23, 0
        %s404 = smul.addr %s401, 2
        %s405 = sadd.s32 %s403, %s404
        %s406 = smul.addr %s405, 8
        %s407 = scalar_lea.vmem %s5, %s406
      $region52: #{tpu_custom_call.1} parent=47 // pred_fallthru
        _
    $region48: #{tpu_custom_call.1} parent=5 // pred_fallthru
      _
  $region6: #{tpu_custom_call.1} parent=0 // loop_footer
    %s15 = sadd.s32 1, %s11
  $region7: #{tpu_custom_call.1} parent=0 // loop_footer_branch
    %10 = sbr.rel target = $region3
  $region8: #{tpu_custom_call.1} parent=0 // loop_exit
    _

</llo_original>
